<compile_context>
chip_gen: v7x
topology: tpu7x:2x2x1
jax: 0.10.0
libtpu: 0.0.40
codegen_flags: <defaults>
</compile_context>

<pallas_src>
from functools import partial

import jax
import jax.numpy as jnp
from jax.experimental import pallas as pl
from jax.experimental.pallas import tpu as pltpu


def _round_up(x, m):
    return (x + m - 1) // m * m


def _vmem_budget_bytes():
    """~3/8 of per-core VMEM: ~24 MiB on v7x (64 MiB/TC), ~48 MiB on v5e/v6e (128 MiB)."""
    total = None
    try:
        total = getattr(pltpu.get_tpu_info(), "vmem_capacity_bytes", None)
    except Exception:
        total = None
    if not total:
        total = 64 * 1024 * 1024          # conservative fallback (v7x-sized VMEM)
    return max(16 * 1024 * 1024, (int(total) * 3) // 8)


def _pick_tile_len(c_in, c_out, n_phase, halo, l_out, io_isz, out_isz, n_taps,
                   *, tl_cap, vmem_budget):
    """Largest multiple-of-128 output tile that keeps the pipeline inside the VMEM budget."""
    tl = max(128, _round_up(min(max(l_out, 1), tl_cap), 128))
    while tl > 128:
        blocks = 2 * (io_isz * n_phase * c_in * (tl + halo)   # double-buffered input block
                      + out_isz * c_out * tl)                 # double-buffered output block
        temps = 4 * tl * (2 * c_in + 2 * c_out)               # f32 acc/dw/pw temporaries
        weights = io_isz * (n_taps * c_in + c_out * c_in) + 4 * (c_in + c_out)
        if blocks + temps + weights <= vmem_budget:
            break
        tl -= 128
    return tl


def _sepconv1d_kernel(x_ref, wdw_ref, bdw_ref, wpw_ref, bpw_ref, o_ref,
                      *, n_taps, stride, tl, use_mxu, apply_relu):
    # x_ref   : (S, C_in, TL + halo)   input tile with halo folded in (stride phases)
    # wdw_ref : (K, C_in, 1)           depthwise taps (pre-transposed in the wrapper)
    # bdw_ref : (C_in, 1)              depthwise bias (f32)
    # wpw_ref : (C_out, C_in)          pointwise weight
    # bpw_ref : (C_out, 1)             pointwise bias (f32)
    # o_ref   : (C_out, TL)            output tile (lane-dense, TL % 128 == 0)
    c_in = x_ref.shape[1]
    c_out = o_ref.shape[0]

    # ---- depthwise conv (groups = C_in): K unrolled VPU multiply-accumulates ----
    # Every tap read is a static, unit-stride lane slice (stride handled by the
    # wrapper-side phase deinterleave).
    acc = jnp.zeros((c_in, tl), dtype=jnp.float32)
    for k in range(n_taps):                               # static unrolled tap loop
        phase, off = k % stride, k // stride
        sl = x_ref[phase, :, off:off + tl].astype(jnp.float32)     # (C_in, TL)
        acc = acc + sl * wdw_ref[k].astype(jnp.float32)            # (C_in, 1) lane-bcast
    dw = acc + bdw_ref[...].astype(jnp.float32)                    # (C_in, TL), f32

    # ---- pointwise (1x1) conv: channel mixing ----
    if use_mxu:
        pw = jnp.dot(wpw_ref[...].astype(jnp.float32), dw,
                     preferred_element_type=jnp.float32)           # (C_out, TL)
    else:
        # Tiny contraction dim: keep it on the VPU.
        pw = jnp.zeros((c_out, tl), dtype=jnp.float32)
        for c in range(c_in):                             # static unrolled channel loop
            pw = pw + wpw_ref[:, c:c + 1].astype(jnp.float32) * dw[c:c + 1, :]
    pw = pw + bpw_ref[...].astype(jnp.float32)

    if apply_relu:                                        # SepConv1d's default activation
        pw = jnp.maximum(pw, 0.0)

    o_ref[...] = pw.astype(o_ref.dtype)


def sep_conv1d(x, w_dw, b_dw, w_pw, b_pw, *, stride, pad, apply_relu=False,
               tl_cap=4096, use_mxu=None, io_dtype=None):
    """Forward pass of SepConv1d (ReLU optional, drop=None).  x: (B, C_in, L)."""
    B, C_in, L = x.shape
    K = w_dw.shape[1]
    C_out = w_pw.shape[0]
    S = stride
    L_pad = L + 2 * pad
    L_out = (L_pad - K) // S + 1

    io_dtype = jnp.dtype(x.dtype if io_dtype is None else io_dtype)
    out_dtype = x.dtype
    io_isz = io_dtype.itemsize
    out_isz = jnp.dtype(out_dtype).itemsize

    halo = (K - 1) // S                   # extra deinterleaved columns a tile needs
    if use_mxu is None:
        use_mxu = (C_in >= 16) or (C_in * C_out >= 512)

    budget = _vmem_budget_bytes()
    TL = _pick_tile_len(C_in, C_out, S, halo, L_out, io_isz, out_isz, K,
                        tl_cap=tl_cap, vmem_budget=budget)
    if B == 1 and L_out > 128:
        # Keep >= 2 parallel grid slices so both v7x TensorCores get work.
        TL = min(TL, _round_up(pl.cdiv(L_out, 2), 128))
    n_tiles = pl.cdiv(L_out, TL)
    Ltot = n_tiles * TL                   # lane-dense (padded) output length
    TW = TL + halo                        # input tile width incl. folded halo

    # ---- wrapper-side layout plumbing (plain XLA) ----
    # zero-pad, (if stride>1) deinterleave the length axis into `stride` phases so
    # every in-kernel tap slice is unit-stride, then fold the cross-tile halo into
    # each tile:  xtile[b, i, p, c, j] = x_pad[b, c, (i*TL + j)*S + p]
    Lext = (n_tiles + 1) * TL if halo > 0 else Ltot
    total_len = max(L_pad, S * Lext)
    xw = x if io_dtype == x.dtype else x.astype(io_dtype)
    x_pad = jnp.pad(xw, ((0, 0), (0, 0), (pad, total_len - L - pad)))
    if S == 1:
        xd = x_pad[:, :, :Lext][:, None]                               # (B,1,C,Lext)
    else:
        xd = x_pad[:, :, :S * Lext].reshape(B, C_in, Lext, S).transpose(0, 3, 1, 2)
    win = xd.reshape(B, S, C_in, -1, TL)                               # (B,S,C,nt(+1),TL)
    if halo > 0:
        xtile = jnp.concatenate([win[:, :, :, :n_tiles, :],
                                 win[:, :, :, 1:, :halo]], axis=-1)    # (B,S,C,nt,TW)
    else:
        xtile = win
    xtile = jnp.transpose(xtile, (0, 3, 1, 2, 4))                      # (B,nt,S,C,TW)

    wdw_t = w_dw.T[:, :, None].astype(io_dtype)   # (K, C_in, 1): per-tap indexed loads
    wpw_c = w_pw.astype(io_dtype)
    b_dw = b_dw.astype(jnp.float32)
    b_pw = b_pw.astype(jnp.float32)

    kern = partial(_sepconv1d_kernel, n_taps=K, stride=S, tl=TL,
                   use_mxu=use_mxu, apply_relu=apply_relu)

    # VMEM limit derived from the actual footprint (+ margin); stays well within a
    # single v7x TensorCore's 64 MiB.
    footprint = (2 * (io_isz * S * C_in * TW + out_isz * C_out * TL)
                 + 4 * TL * (2 * C_in + 2 * C_out)
                 + io_isz * (K * C_in + C_out * C_in) + 4 * (C_in + C_out))
    vmem_limit = int(max(budget, footprint) + (8 << 20))

    n_steps = B * n_tiles
    flops = 2 * n_steps * TL * (C_in * K + C_in * C_out)
    bytes_accessed = (io_isz * xtile.size
                      + out_isz * B * C_out * Ltot
                      + n_steps * (io_isz * (K * C_in + C_out * C_in)
                                   + 4 * (C_in + C_out)))

    out = pl.pallas_call(
        kern,
        out_shape=jax.ShapeDtypeStruct((B, C_out, Ltot), out_dtype),
        grid_spec=pltpu.PrefetchScalarGridSpec(
            num_scalar_prefetch=0,
            grid=(B, n_tiles),
            in_specs=[
                # NOTE: on v5e, if a profile shows exposed DMA, add
                # pipeline_mode=pl.Buffered(3) to this input spec.
                pl.BlockSpec((None, None, S, C_in, TW), lambda b, i: (b, i, 0, 0, 0)),
                pl.BlockSpec((K, C_in, 1), lambda b, i: (0, 0, 0)),
                pl.BlockSpec((C_in, 1), lambda b, i: (0, 0)),
                pl.BlockSpec((C_out, C_in), lambda b, i: (0, 0)),
                pl.BlockSpec((C_out, 1), lambda b, i: (0, 0)),
            ],
            out_specs=pl.BlockSpec((None, C_out, TL), lambda b, i: (b, 0, i)),
        ),
        compiler_params=pltpu.CompilerParams(
            dimension_semantics=("parallel", "parallel"),
            vmem_limit_bytes=vmem_limit,
        ),
        cost_estimate=pl.CostEstimate(flops=flops, transcendentals=0,
                                      bytes_accessed=bytes_accessed),
    )(xtile, wdw_t, b_dw, wpw_c, b_pw)

    if Ltot != L_out:
        out = out[:, :, :L_out]
    return out


def ref_sep_conv1d(x, w_dw, b_dw, w_pw, b_pw, *, stride, pad, apply_relu=False):
    """Pure-JAX reference with identical semantics to the PyTorch module."""
    B, C, L = x.shape
    K = w_dw.shape[1]
    L_out = (L + 2 * pad - K) // stride + 1
    xp = jnp.pad(x, ((0, 0), (0, 0), (pad, pad)))
    dw = jnp.zeros((B, C, L_out), dtype=jnp.float32)
    for k in range(K):
        end = k + (L_out - 1) * stride + 1
        dw = dw + xp[:, :, k:end:stride] * w_dw[None, :, k:k + 1]
    dw = dw + b_dw[None, :, :]
    out = jnp.einsum('oc,bct->bot', w_pw, dw,
                     precision=jax.lax.Precision.HIGHEST) + b_pw[None, :, :]
    if apply_relu:
        out = jnp.maximum(out, 0.0)
    return out


if __name__ == "__main__":
    key = jax.random.PRNGKey(0)

    def make_params(k, ni, no, ksz):
        k1, k2, k3, k4 = jax.random.split(k, 4)
        w_dw = jax.random.normal(k1, (ni, ksz), dtype=jnp.float32) * 0.1
        b_dw = jax.random.normal(k2, (ni, 1), dtype=jnp.float32) * 0.1
        w_pw = jax.random.normal(k3, (no, ni), dtype=jnp.float32) * 0.1
        b_pw = jax.random.normal(k4, (no, 1), dtype=jnp.float32) * 0.1
        return w_dw, b_dw, w_pw, b_pw

    def check(out, ref, shape, atol=1e-4, rtol=1e-4):
        assert out.shape == shape, (out.shape, shape)
        assert jnp.allclose(out, ref, atol=atol, rtol=rtol)

    # 1) _SepConv1d core: ni=4, no=8, kernel=3, stride=1, pad=1 (single tile, VPU pointwise)
    kx, kp, key = jax.random.split(key, 3)
    B, NI, NO, L, K, STRIDE, PAD = 2, 4, 8, 16, 3, 1, 1
    x = jax.random.normal(kx, (B, NI, L), dtype=jnp.float32)
    params = make_params(kp, NI, NO, K)
    out = jax.block_until_ready(sep_conv1d(x, *params, stride=STRIDE, pad=PAD))
    ref = ref_sep_conv1d(x, *params, stride=STRIDE, pad=PAD)
    check(out, ref, (B, NO, 16))

    # 1b) same inputs through the MXU pointwise path
    out = jax.block_until_ready(
        sep_conv1d(x, *params, stride=STRIDE, pad=PAD, use_mxu=True))
    check(out, ref, (B, NO, 16))

    # 2) stride=2 path (phase-deinterleaved, unit-stride tap slices)
    out = jax.block_until_ready(sep_conv1d(x, *params, stride=2, pad=PAD))
    ref = ref_sep_conv1d(x, *params, stride=2, pad=PAD)
    check(out, ref, (B, NO, 8))

    # 3) SepConv1d (fused ReLU), stride=2, multi-tile length axis (tl_cap=128 -> 2 tiles)
    kx, kp, key = jax.random.split(key, 3)
    B, NI, NO, L, K, STRIDE, PAD = 2, 8, 16, 400, 5, 2, 2
    x3 = jax.random.normal(kx, (B, NI, L), dtype=jnp.float32)
    params3 = make_params(kp, NI, NO, K)
    out = jax.block_until_ready(
        sep_conv1d(x3, *params3, stride=STRIDE, pad=PAD, apply_relu=True, tl_cap=128))
    ref3 = ref_sep_conv1d(x3, *params3, stride=STRIDE, pad=PAD, apply_relu=True)
    check(out, ref3, (B, NO, 200))

    # 4) B=1 path: grid keeps >= 2 tiles so both v7x TensorCores get work
    kx, kp, key = jax.random.split(key, 3)
    B, NI, NO, L, K, STRIDE, PAD = 1, 6, 12, 300, 3, 1, 1
    x4 = jax.random.normal(kx, (B, NI, L), dtype=jnp.float32)
    params4 = make_params(kp, NI, NO, K)
    out = jax.block_until_ready(
        sep_conv1d(x4, *params4, stride=STRIDE, pad=PAD, apply_relu=True))
    ref4 = ref_sep_conv1d(x4, *params4, stride=STRIDE, pad=PAD, apply_relu=True)
    check(out, ref4, (B, NO, 300))

    # 5) bf16 storage path (halved HBM traffic on v6e/v7x); f32 accumulation inside
    out = jax.block_until_ready(
        sep_conv1d(x3, *params3, stride=2, pad=2, apply_relu=True, tl_cap=128,
                   io_dtype=jnp.bfloat16))
    check(out, ref3, (2, 16, 200), atol=2e-2, rtol=2e-2)

    print("KERNEL_OK")
</pallas_src>

<mosaic_0001>
module attributes {stable_mosaic.version = 11 : i64} {
  func.func @_sepconv1d_kernel(%arg0: i32, %arg1: i32, %arg2: memref<1x1x1x4x130xf32, #tpu.memory_space<vmem>>, %arg3: memref<3x4x1xf32, #tpu.memory_space<vmem>>, %arg4: memref<4x1xf32, #tpu.memory_space<vmem>>, %arg5: memref<8x4xf32, #tpu.memory_space<vmem>>, %arg6: memref<8x1xf32, #tpu.memory_space<vmem>>, %arg7: memref<1x8x128xf32, #tpu.memory_space<vmem>>) attributes {dimension_semantics = [#tpu.dimension_semantics<parallel>, #tpu.dimension_semantics<parallel>], iteration_bounds = array<i64: 2, 1>, scalar_prefetch = 0 : i64, scratch_operands = 0 : i64, tpu.core_type = #tpu.core_type<tc>, window_params = [{transform_indices = @transform_0, window_bounds = array<i64: 1, 1, 1, 4, 130>}, {pipeline_mode = #tpu.pipeline_mode<synchronous>, transform_indices = @transform_1, window_bounds = array<i64: 3, 4, 1>}, {pipeline_mode = #tpu.pipeline_mode<synchronous>, transform_indices = @transform_2, window_bounds = array<i64: 4, 1>}, {pipeline_mode = #tpu.pipeline_mode<synchronous>, transform_indices = @transform_3, window_bounds = array<i64: 8, 4>}, {pipeline_mode = #tpu.pipeline_mode<synchronous>, transform_indices = @transform_4, window_bounds = array<i64: 8, 1>}, {transform_indices = @transform_5, window_bounds = array<i64: 1, 8, 128>}]} {
    %cst = arith.constant 0.000000e+00 : f32
    %0 = vector.broadcast %cst : f32 to vector<4x128xf32>
    %c0 = arith.constant 0 : index
    %c0_0 = arith.constant 0 : index
    %c0_1 = arith.constant 0 : index
    %c0_2 = arith.constant 0 : index
    %c0_3 = arith.constant 0 : index
    %1 = vector.load %arg2[%c0, %c0_0, %c0_1, %c0_2, %c0_3] : memref<1x1x1x4x130xf32, #tpu.memory_space<vmem>>, vector<1x1x1x4x128xf32>
    %2 = vector.shape_cast %1 : vector<1x1x1x4x128xf32> to vector<4x128xf32>
    %c0_4 = arith.constant 0 : index
    %c0_5 = arith.constant 0 : index
    %c0_6 = arith.constant 0 : index
    %3 = vector.load %arg3[%c0_4, %c0_5, %c0_6] : memref<3x4x1xf32, #tpu.memory_space<vmem>>, vector<1x4x1xf32>
    %4 = vector.shape_cast %3 : vector<1x4x1xf32> to vector<4x1xf32>
    %5 = vector.broadcast %4 : vector<4x1xf32> to vector<4x128xf32>
    %6 = arith.mulf %2, %5 : vector<4x128xf32>
    %7 = arith.addf %0, %6 : vector<4x128xf32>
    %c0_7 = arith.constant 0 : index
    %c0_8 = arith.constant 0 : index
    %c0_9 = arith.constant 0 : index
    %c0_10 = arith.constant 0 : index
    %c1 = arith.constant 1 : index
    %8 = vector.load %arg2[%c0_7, %c0_8, %c0_9, %c0_10, %c1] : memref<1x1x1x4x130xf32, #tpu.memory_space<vmem>>, vector<1x1x1x4x128xf32>
    %9 = vector.shape_cast %8 : vector<1x1x1x4x128xf32> to vector<4x128xf32>
    %c1_11 = arith.constant 1 : index
    %c0_12 = arith.constant 0 : index
    %c0_13 = arith.constant 0 : index
    %10 = vector.load %arg3[%c1_11, %c0_12, %c0_13] : memref<3x4x1xf32, #tpu.memory_space<vmem>>, vector<1x4x1xf32>
    %11 = vector.shape_cast %10 : vector<1x4x1xf32> to vector<4x1xf32>
    %12 = vector.broadcast %11 : vector<4x1xf32> to vector<4x128xf32>
    %13 = arith.mulf %9, %12 : vector<4x128xf32>
    %14 = arith.addf %7, %13 : vector<4x128xf32>
    %c0_14 = arith.constant 0 : index
    %c0_15 = arith.constant 0 : index
    %c0_16 = arith.constant 0 : index
    %c0_17 = arith.constant 0 : index
    %c2 = arith.constant 2 : index
    %15 = vector.load %arg2[%c0_14, %c0_15, %c0_16, %c0_17, %c2] : memref<1x1x1x4x130xf32, #tpu.memory_space<vmem>>, vector<1x1x1x4x128xf32>
    %16 = vector.shape_cast %15 : vector<1x1x1x4x128xf32> to vector<4x128xf32>
    %c2_18 = arith.constant 2 : index
    %c0_19 = arith.constant 0 : index
    %c0_20 = arith.constant 0 : index
    %17 = vector.load %arg3[%c2_18, %c0_19, %c0_20] : memref<3x4x1xf32, #tpu.memory_space<vmem>>, vector<1x4x1xf32>
    %18 = vector.shape_cast %17 : vector<1x4x1xf32> to vector<4x1xf32>
    %19 = vector.broadcast %18 : vector<4x1xf32> to vector<4x128xf32>
    %20 = arith.mulf %16, %19 : vector<4x128xf32>
    %21 = arith.addf %14, %20 : vector<4x128xf32>
    %c0_21 = arith.constant 0 : index
    %c0_22 = arith.constant 0 : index
    %22 = vector.load %arg4[%c0_21, %c0_22] : memref<4x1xf32, #tpu.memory_space<vmem>>, vector<4x1xf32>
    %23 = vector.broadcast %22 : vector<4x1xf32> to vector<4x128xf32>
    %24 = arith.addf %21, %23 : vector<4x128xf32>
    %cst_23 = arith.constant 0.000000e+00 : f32
    %25 = vector.broadcast %cst_23 : f32 to vector<8x128xf32>
    %c0_24 = arith.constant 0 : index
    %c0_25 = arith.constant 0 : index
    %26 = vector.load %arg5[%c0_24, %c0_25] : memref<8x4xf32, #tpu.memory_space<vmem>>, vector<8x1xf32>
    %27 = vector.extract_strided_slice %24 {offsets = [0, 0], sizes = [1, 128], strides = [1, 1]} : vector<4x128xf32> to vector<1x128xf32>
    %28 = vector.broadcast %26 : vector<8x1xf32> to vector<8x128xf32>
    %29 = vector.broadcast %27 : vector<1x128xf32> to vector<8x128xf32>
    %30 = arith.mulf %28, %29 : vector<8x128xf32>
    %31 = arith.addf %25, %30 : vector<8x128xf32>
    %c0_26 = arith.constant 0 : index
    %c1_27 = arith.constant 1 : index
    %32 = vector.load %arg5[%c0_26, %c1_27] : memref<8x4xf32, #tpu.memory_space<vmem>>, vector<8x1xf32>
    %33 = vector.extract_strided_slice %24 {offsets = [1, 0], sizes = [1, 128], strides = [1, 1]} : vector<4x128xf32> to vector<1x128xf32>
    %34 = vector.broadcast %32 : vector<8x1xf32> to vector<8x128xf32>
    %35 = vector.broadcast %33 : vector<1x128xf32> to vector<8x128xf32>
    %36 = arith.mulf %34, %35 : vector<8x128xf32>
    %37 = arith.addf %31, %36 : vector<8x128xf32>
    %c0_28 = arith.constant 0 : index
    %c2_29 = arith.constant 2 : index
    %38 = vector.load %arg5[%c0_28, %c2_29] : memref<8x4xf32, #tpu.memory_space<vmem>>, vector<8x1xf32>
    %39 = vector.extract_strided_slice %24 {offsets = [2, 0], sizes = [1, 128], strides = [1, 1]} : vector<4x128xf32> to vector<1x128xf32>
    %40 = vector.broadcast %38 : vector<8x1xf32> to vector<8x128xf32>
    %41 = vector.broadcast %39 : vector<1x128xf32> to vector<8x128xf32>
    %42 = arith.mulf %40, %41 : vector<8x128xf32>
    %43 = arith.addf %37, %42 : vector<8x128xf32>
    %c0_30 = arith.constant 0 : index
    %c3 = arith.constant 3 : index
    %44 = vector.load %arg5[%c0_30, %c3] : memref<8x4xf32, #tpu.memory_space<vmem>>, vector<8x1xf32>
    %45 = vector.extract_strided_slice %24 {offsets = [3, 0], sizes = [1, 128], strides = [1, 1]} : vector<4x128xf32> to vector<1x128xf32>
    %46 = vector.broadcast %44 : vector<8x1xf32> to vector<8x128xf32>
    %47 = vector.broadcast %45 : vector<1x128xf32> to vector<8x128xf32>
    %48 = arith.mulf %46, %47 : vector<8x128xf32>
    %49 = arith.addf %43, %48 : vector<8x128xf32>
    %c0_31 = arith.constant 0 : index
    %c0_32 = arith.constant 0 : index
    %50 = vector.load %arg6[%c0_31, %c0_32] : memref<8x1xf32, #tpu.memory_space<vmem>>, vector<8x1xf32>
    %51 = vector.broadcast %50 : vector<8x1xf32> to vector<8x128xf32>
    %52 = arith.addf %49, %51 : vector<8x128xf32>
    %c0_33 = arith.constant 0 : index
    %c0_34 = arith.constant 0 : index
    %c0_35 = arith.constant 0 : index
    %53 = vector.load %arg7[%c0_33, %c0_34, %c0_35] : memref<1x8x128xf32, #tpu.memory_space<vmem>>, vector<1x8x128xf32>
    %54 = vector.shape_cast %53 : vector<1x8x128xf32> to vector<8x128xf32>
    %55 = vector.shape_cast %52 : vector<8x128xf32> to vector<1x8x128xf32>
    tpu.vector_store %arg7[%c0_33, %c0_34, %c0_35], %55 {strides = array<i32>} : memref<1x8x128xf32, #tpu.memory_space<vmem>>, vector<1x8x128xf32>,
    return
  }
  func.func @transform_0(%arg0: i32, %arg1: i32) -> (i32, i32, i32, i32, i32) {
    %c0_i32 = arith.constant 0 : i32
    %c0_i32_0 = arith.constant 0 : i32
    %c0_i32_1 = arith.constant 0 : i32
    %c0_i32_2 = arith.constant 0 : i32
    return %arg0, %arg1, %c0_i32, %c0_i32_0, %c0_i32_1 : i32, i32, i32, i32, i32
  }
  func.func @transform_1(%arg0: i32, %arg1: i32) -> (i32, i32, i32) {
    %c0_i32 = arith.constant 0 : i32
    %c0_i32_0 = arith.constant 0 : i32
    %c0_i32_1 = arith.constant 0 : i32
    %c0_i32_2 = arith.constant 0 : i32
    return %c0_i32, %c0_i32_0, %c0_i32_1 : i32, i32, i32
  }
  func.func @transform_2(%arg0: i32, %arg1: i32) -> (i32, i32) {
    %c0_i32 = arith.constant 0 : i32
    %c0_i32_0 = arith.constant 0 : i32
    %c0_i32_1 = arith.constant 0 : i32
    return %c0_i32, %c0_i32_0 : i32, i32
  }
  func.func @transform_3(%arg0: i32, %arg1: i32) -> (i32, i32) {
    %c0_i32 = arith.constant 0 : i32
    %c0_i32_0 = arith.constant 0 : i32
    %c0_i32_1 = arith.constant 0 : i32
    return %c0_i32, %c0_i32_0 : i32, i32
  }
  func.func @transform_4(%arg0: i32, %arg1: i32) -> (i32, i32) {
    %c0_i32 = arith.constant 0 : i32
    %c0_i32_0 = arith.constant 0 : i32
    %c0_i32_1 = arith.constant 0 : i32
    return %c0_i32, %c0_i32_0 : i32, i32
  }
  func.func @transform_5(%arg0: i32, %arg1: i32) -> (i32, i32, i32) {
    %c0_i32 = arith.constant 0 : i32
    %c0_i32_0 = arith.constant 0 : i32
    return %arg0, %c0_i32, %arg1 : i32, i32, i32
  }
}

</mosaic_0001>

<llo_original>
// kernel: tpu_custom_call.1
$region0: #{tpu_custom_call.1}
  #allocation0 [shape = 'u32[]', space=smem, size = 0x4, offset = 0x4, fixed_abs, tag = 'smem constant byte address 0x4 - core index']
  #allocation1 [shape = 'u32[144,128]{1,0:T(1,128)}', space=vmem, size = 0x12000, scoped, tag = 'internal scratch']
  %s0 = inlined_call_operand.vmem [shape: f32[2,1,1,4,130], index: 0, kind: input, shape index: {}]
  %s1 = inlined_call_operand.vmem [shape: f32[3,4,1], index: 1, kind: input, shape index: {}]
  %s2 = inlined_call_operand.vmem [shape: f32[4,1], index: 2, kind: input, shape index: {}]
  %s3 = inlined_call_operand.vmem [shape: f32[8,4], index: 3, kind: input, shape index: {}]
  %s4 = inlined_call_operand.vmem [shape: f32[8,1], index: 4, kind: input, shape index: {}]
  %s5 = inlined_call_operand.hbm [shape: f32[2,8,128], index: 5, kind: output, shape index: {}]
  %s6 = sld [smem:[#allocation0]]
  $region53: #{tpu_custom_call.1} parent=0
    _
  %s8 = ssub.s32 1, %s6
  %s9 = scalar_select 0, %s8, %s6
  $region1: #{tpu_custom_call.1} parent=0
    #allocation2 [shape = 'u8[8192]{0}', space=vmem, size = 0x2000, scoped, tag = 'output window, operand 0']
    #allocation3 [shape = 's32[2]{0}', space=sflag, size = 0x8, scoped, tag = 'scoped memory for tpu_custom_call.1']
    %10 = vsyncpa [#allocation3], 0
    %s11 = scalar_lea.sflag [#allocation3], 1
    %12 = vsyncpa %s11, 0
    loop: start=0, step=1, limit=4
    $region2: #{tpu_custom_call.1} parent=1 // loop_pre_header
      _
    $region3: #{tpu_custom_call.1} parent=1 // loop_header
      %s14 = sphi 0, %s18
      %p15 = scmp.ge.s32.totalorder %s14, 4
      %s21 = sphi 0, %s33
      %s22 = sphi 0, %s29
      %s23 = sphi 0, %s21
      %s24 = sphi 0, %s22
      %s25 = sphi 0, %s23
      %s26 = sphi 0, %s24
      %s38 = sphi 0, %s40
      %s41 = sphi 0, %s38
      %s42 = sphi 0, %s41
      %s58 = sphi 0, %s42
      %s62 = sphi 0, %s62
      %s64 = sphi 0, %s62
      %s65 = sphi 0, %s64
      %s79 = sphi 0, %s65
      %s83 = sphi 0, %s83
      %s85 = sphi 0, %s83
      %s86 = sphi 0, %s85
      %s100 = sphi 0, %s86
      %s104 = sphi 0, %s104
      %s106 = sphi 0, %s104
      %s107 = sphi 0, %s106
      %s121 = sphi 0, %s107
      %s125 = sphi 0, %s125
      %s127 = sphi 0, %s125
      %s128 = sphi 0, %s127
      %s142 = sphi 0, %s128
      %s150 = sphi 0, %s152
      %s153 = sphi 0, %s150
      %s154 = sphi 0, %s153
      %s170 = sphi 0, %s154
    $region4: #{tpu_custom_call.1} parent=1 // loop_header_branch
      %17 = sbr.rel (%p15) target = $region8
    $region5: #{tpu_custom_call.1} parent=1 // loop_body
      %s19 = ssub.s32 %s14, 1
      %s20 = ssub.s32 %s14, 2
      %s27 = sadd.s32 1, %s22
      %p28 = scmp.ge.s32.totalorder %s27, 1
      %s29 = scalar_select %p28, 0, %s27
      %s30 = sadd.s32 1, %s21
      %s31 = scalar_select %p28, %s30, %s21
      %p32 = scmp.ge.s32.totalorder %s31, 2
      %s33 = scalar_select %p32, 0, %s31
      %s34 = ssub.s32 %s21, %s33
      %s35 = ssub.s32 %s22, %s29
      %s36 = sor.u32 %s34, %s35
      %p37 = scmp.eq.s32.totalorder %s36, 0
      %s39 = sadd.s32 %s38, 1
      %s40 = scalar_select %p37, %s38, %s39
      %p43 = pneg %p37
      %p44 = scmp.eq.s32.totalorder %s14, 1
      %p45 = por %p43, %p44
      %p46 = scmp.ne.s32.totalorder %s38, %s41
      %p47 = scmp.eq.s32.totalorder %s14, 0
      %p48 = por %p46, %p47
      %p49 = scmp.ne.s32.totalorder %s38, %s41
      %p50 = scmp.eq.s32.totalorder %s19, 1
      %p51 = por %p49, %p50
      %p52 = scmp.ne.s32.totalorder %s41, %s42
      %p53 = scmp.eq.s32.totalorder %s19, 0
      %p54 = por %p52, %p53
      %p55 = scmp.ne.s32.totalorder %s41, %s42
      %p56 = scmp.eq.s32.totalorder %s20, 1
      %p57 = por %p55, %p56
      %p59 = scmp.ne.s32.totalorder %s42, %s58
      %p60 = scmp.eq.s32.totalorder %s20, 0
      %p61 = por %p59, %p60
      %s63 = sadd.s32 %s62, 1
      %p66 = scmp.eq.s32.totalorder %s14, 1
      %p67 = scmp.ne.s32.totalorder %s62, %s64
      %p68 = scmp.eq.s32.totalorder %s14, 0
      %p69 = por %p67, %p68
      %p70 = scmp.ne.s32.totalorder %s62, %s64
      %p71 = scmp.eq.s32.totalorder %s19, 1
      %p72 = por %p70, %p71
      %p73 = scmp.ne.s32.totalorder %s64, %s65
      %p74 = scmp.eq.s32.totalorder %s19, 0
      %p75 = por %p73, %p74
      %p76 = scmp.ne.s32.totalorder %s64, %s65
      %p77 = scmp.eq.s32.totalorder %s20, 1
      %p78 = por %p76, %p77
      %p80 = scmp.ne.s32.totalorder %s65, %s79
      %p81 = scmp.eq.s32.totalorder %s20, 0
      %p82 = por %p80, %p81
      %s84 = sadd.s32 %s83, 1
      %p87 = scmp.eq.s32.totalorder %s14, 1
      %p88 = scmp.ne.s32.totalorder %s83, %s85
      %p89 = scmp.eq.s32.totalorder %s14, 0
      %p90 = por %p88, %p89
      %p91 = scmp.ne.s32.totalorder %s83, %s85
      %p92 = scmp.eq.s32.totalorder %s19, 1
      %p93 = por %p91, %p92
      %p94 = scmp.ne.s32.totalorder %s85, %s86
      %p95 = scmp.eq.s32.totalorder %s19, 0
      %p96 = por %p94, %p95
      %p97 = scmp.ne.s32.totalorder %s85, %s86
      %p98 = scmp.eq.s32.totalorder %s20, 1
      %p99 = por %p97, %p98
      %p101 = scmp.ne.s32.totalorder %s86, %s100
      %p102 = scmp.eq.s32.totalorder %s20, 0
      %p103 = por %p101, %p102
      %s105 = sadd.s32 %s104, 1
      %p108 = scmp.eq.s32.totalorder %s14, 1
      %p109 = scmp.ne.s32.totalorder %s104, %s106
      %p110 = scmp.eq.s32.totalorder %s14, 0
      %p111 = por %p109, %p110
      %p112 = scmp.ne.s32.totalorder %s104, %s106
      %p113 = scmp.eq.s32.totalorder %s19, 1
      %p114 = por %p112, %p113
      %p115 = scmp.ne.s32.totalorder %s106, %s107
      %p116 = scmp.eq.s32.totalorder %s19, 0
      %p117 = por %p115, %p116
      %p118 = scmp.ne.s32.totalorder %s106, %s107
      %p119 = scmp.eq.s32.totalorder %s20, 1
      %p120 = por %p118, %p119
      %p122 = scmp.ne.s32.totalorder %s107, %s121
      %p123 = scmp.eq.s32.totalorder %s20, 0
      %p124 = por %p122, %p123
      %s126 = sadd.s32 %s125, 1
      %p129 = scmp.eq.s32.totalorder %s14, 1
      %p130 = scmp.ne.s32.totalorder %s125, %s127
      %p131 = scmp.eq.s32.totalorder %s14, 0
      %p132 = por %p130, %p131
      %p133 = scmp.ne.s32.totalorder %s125, %s127
      %p134 = scmp.eq.s32.totalorder %s19, 1
      %p135 = por %p133, %p134
      %p136 = scmp.ne.s32.totalorder %s127, %s128
      %p137 = scmp.eq.s32.totalorder %s19, 0
      %p138 = por %p136, %p137
      %p139 = scmp.ne.s32.totalorder %s127, %s128
      %p140 = scmp.eq.s32.totalorder %s20, 1
      %p141 = por %p139, %p140
      %p143 = scmp.ne.s32.totalorder %s128, %s142
      %p144 = scmp.eq.s32.totalorder %s20, 0
      %p145 = por %p143, %p144
      %s146 = ssub.s32 %s21, %s33
      %s147 = ssub.s32 %s22, %s29
      %s148 = sor.u32 %s146, %s147
      %p149 = scmp.eq.s32.totalorder %s148, 0
      %s151 = sadd.s32 %s150, 1
      %s152 = scalar_select %p149, %s150, %s151
      %p155 = pneg %p149
      %p156 = scmp.eq.s32.totalorder %s14, 1
      %p157 = por %p155, %p156
      %p158 = scmp.ne.s32.totalorder %s150, %s153
      %p159 = scmp.eq.s32.totalorder %s14, 0
      %p160 = por %p158, %p159
      %p161 = scmp.ne.s32.totalorder %s150, %s153
      %p162 = scmp.eq.s32.totalorder %s19, 1
      %p163 = por %p161, %p162
      %p164 = scmp.ne.s32.totalorder %s153, %s154
      %p165 = scmp.eq.s32.totalorder %s19, 0
      %p166 = por %p164, %p165
      %p167 = scmp.ne.s32.totalorder %s153, %s154
      %p168 = scmp.eq.s32.totalorder %s20, 1
      %p169 = por %p167, %p168
      %p171 = scmp.ne.s32.totalorder %s154, %s170
      %p172 = scmp.eq.s32.totalorder %s20, 0
      %p173 = por %p171, %p172
      %p174 = scmp.le.s32.totalorder 1, %s14
      %p175 = scmp.lt.s32.totalorder %s14, 3
      %p176 = pnand %p174, %p175
      %p177 = pneg %p176
      // Predicated region
      $region9: #{tpu_custom_call.1} parent=5 // pred_check
        _
      $region10: #{tpu_custom_call.1} parent=5 // pred_check_branch
        %179 = sbr.rel (%p176) target = $region12
      $region11: #{tpu_custom_call.1} parent=5 // pred_region
        %s180 = ssub.s32 %s14, 1
        // Predicated region
        $region13: #{tpu_custom_call.1} parent=11 // pred_check
          %p181 = pneg %p75
        $region14: #{tpu_custom_call.1} parent=11 // pred_check_branch
          %183 = sbr.rel (%p181) target = $region16
        $region15: #{tpu_custom_call.1} parent=11 // pred_region
          _
        $region16: #{tpu_custom_call.1} parent=11 // pred_fallthru
          _
        // Predicated region
        $region17: #{tpu_custom_call.1} parent=11 // pred_check
          %p184 = pneg %p96
        $region18: #{tpu_custom_call.1} parent=11 // pred_check_branch
          %186 = sbr.rel (%p184) target = $region20
        $region19: #{tpu_custom_call.1} parent=11 // pred_region
          _
        $region20: #{tpu_custom_call.1} parent=11 // pred_fallthru
          _
        // Predicated region
        $region21: #{tpu_custom_call.1} parent=11 // pred_check
          %p187 = pneg %p117
        $region22: #{tpu_custom_call.1} parent=11 // pred_check_branch
          %189 = sbr.rel (%p187) target = $region24
        $region23: #{tpu_custom_call.1} parent=11 // pred_region
          _
        $region24: #{tpu_custom_call.1} parent=11 // pred_fallthru
          _
        // Predicated region
        $region25: #{tpu_custom_call.1} parent=11 // pred_check
          %p190 = pneg %p138
        $region26: #{tpu_custom_call.1} parent=11 // pred_check_branch
          %192 = sbr.rel (%p190) target = $region28
        $region27: #{tpu_custom_call.1} parent=11 // pred_region
          _
        $region28: #{tpu_custom_call.1} parent=11 // pred_fallthru
          _
      $region12: #{tpu_custom_call.1} parent=5 // pred_fallthru
        _
      %p193 = scmp.lt.s32.totalorder %s14, 2
      // Predicated region
      $region29: #{tpu_custom_call.1} parent=5 // pred_check
        %p194 = pneg %p193
      $region30: #{tpu_custom_call.1} parent=5 // pred_check_branch
        %196 = sbr.rel (%p194) target = $region32
      $region31: #{tpu_custom_call.1} parent=5 // pred_region
        // Predicated region
        $region33: #{tpu_custom_call.1} parent=31 // pred_check
          %p197 = pneg %p48
        $region34: #{tpu_custom_call.1} parent=31 // pred_check_branch
          %199 = sbr.rel (%p197) target = $region36
        $region35: #{tpu_custom_call.1} parent=31 // pred_region
          %p200 = scmp.lt.s32.totalorder %s21, 1
          %s201 = scalar_select %p200, %s21, 1
          %p202 = scmp.lt.s32.totalorder %s22, 0
          %s203 = scalar_select %p202, %s22, 0
          %s204 = smul.addr %s203, 2
          %s205 = smul.addr %s201, 2
          %s206 = sadd.s32 %s204, %s205
          %s207 = smul.addr %s206, 4
          %s208 = scalar_lea.vmem %s0, %s207
        $region36: #{tpu_custom_call.1} parent=31 // pred_fallthru
          _
      $region32: #{tpu_custom_call.1} parent=5 // pred_fallthru
        _
      %p209 = scmp.le.s32.totalorder 1, %s14
      %p210 = scmp.lt.s32.totalorder %s14, 3
      %p211 = pnand %p209, %p210
      %p212 = pneg %p211
      // Predicated region
      $region37: #{tpu_custom_call.1} parent=5 // pred_check
        _
      $region38: #{tpu_custom_call.1} parent=5 // pred_check_branch
        %214 = sbr.rel (%p211) target = $region40
      $region39: #{tpu_custom_call.1} parent=5 // pred_region
        %s215 = ssub.s32 %s14, 1
        %p216 = scmp.lt.s32.totalorder %s23, 1
        %s217 = scalar_select %p216, %s23, 1
        %p218 = scmp.lt.s32.totalorder %s24, 0
        %s219 = scalar_select %p218, %s24, 0
        %s220 = smul.addr %s219, 2
        %s221 = smul.addr %s217, 2
        %s222 = sadd.s32 %s220, %s221
        %s223 = smul.addr %s222, 4
        %s224 = scalar_lea.vmem %s0, %s223
        %p225 = pneg %p54
        %p226 = pneg %p51
        %p227 = pneg %p75
        %p228 = pneg %p72
        %p229 = pneg %p96
        %p230 = pneg %p93
        %p231 = pneg %p117
        %p232 = pneg %p114
        %p233 = pneg %p138
        %p234 = pneg %p135
        %p235 = pneg %p166
        %p236 = pneg %p163
        %s237 = sand.u32 %s153, 1
        %s238 = scalar_lea.sflag [#allocation3], %s237
        %s239 = sand.u32 %s153, 1
        %s240 = smul.addr %s239, 8
        %s241 = scalar_lea.vmem [#allocation2], %s240
        %p242 = scmp.lt.s32.totalorder %s23, 1
        %s243 = scalar_select %p242, %s23, 1
        %p244 = scmp.lt.s32.totalorder %s24, 0
        %s245 = scalar_select %p244, %s24, 0
        %s246 = smul.addr %s245, 2
        %s247 = smul.addr %s243, 2
        %s248 = sadd.s32 %s246, %s247
        %s249 = smul.addr %s248, 4
        %s250 = scalar_lea.vmem %s0, %s249
        %v251 = vld [vmem:[%s250] sm:$0xf]
        %v252 = vld [vmem:[%s1] sm:$0xf]
        %254 = vset.pattern.permute.xlu0 0
        %255 = vperm.xlu0 %254, %v252
        %v256 = vpop.permute.xlu0 %255
        %v258 = vmul.f32 %v251, %v256
        %v259 = vadd.f32 %v258, 0.0
        %v260 = vld [vmem:[%s250] sm:$0xff]
        %s261 = scalar_lea.vmem %s1, 4
        %v262 = vld [vmem:[%s261] sm:$0xf]
        %264 = vset.pattern.permute.xlu0 0
        %265 = vperm.xlu0 %264, %v262
        %v266 = vpop.permute.xlu0 %265
        %v268 = vmul.f32 %v260, %v266
        %270 = vrot.lane.b32.xlu0 %v268, 127
        %v271 = vpop.permute.xlu0 %270
        %v272 = vrot.slane %v271, 4
        %vm273 = vcmask 1039360
        %v274 = vsel %vm273, %v271, %v272
        %v276 = vadd.f32 %v259, %v274
        %s277 = scalar_lea.vmem %s1, 8
        %v278 = vld [vmem:[%s277] sm:$0xf]
        %280 = vset.pattern.permute.xlu0 0
        %281 = vperm.xlu0 %280, %v278
        %v282 = vpop.permute.xlu0 %281
        %v284 = vmul.f32 %v260, %v282
        %286 = vrot.lane.b32.xlu0 %v284, 126
        %v287 = vpop.permute.xlu0 %286
        %v288 = vrot.slane %v287, 4
        %vm289 = vcmask 1031168
        %v290 = vsel %vm289, %v287, %v288
        %v292 = vadd.f32 %v276, %v290
        %v293 = vld [vmem:[%s2] sm:$0xf]
        %295 = vset.pattern.permute.xlu0 0
        %296 = vperm.xlu0 %295, %v293
        %v297 = vpop.permute.xlu0 %296
        %v299 = vadd.f32 %v292, %v297
        %v300 = vld [vmem:[%s3] sm:$0xff]
        %302 = vset.pattern.permute.xlu0 0
        %303 = vperm.xlu0 %302, %v300
        %v304 = vpop.permute.xlu0 %303
        %v306 = vlaneseq
        %v307 = vshrl.u32 %v306, 7
        %v308 = vsub.s32 0, %v307
        %v309 = vrot.slane %v299, %v308
        %v310 = vmul.f32 %v304, %v309
        %v311 = vadd.f32 %v310, 0.0
        %312 = vset.pattern.permute.xlu0 1
        %313 = vperm.xlu0 %312, %v300
        %v314 = vpop.permute.xlu0 %313
        %v316 = vlaneseq
        %v317 = vshrl.u32 %v316, 7
        %v318 = vsub.s32 1, %v317
        %v319 = vrot.slane %v299, %v318
        %v320 = vmul.f32 %v314, %v319
        %v321 = vadd.f32 %v311, %v320
        %322 = vset.pattern.permute.xlu0 2
        %323 = vperm.xlu0 %322, %v300
        %v324 = vpop.permute.xlu0 %323
        %v326 = vlaneseq
        %v327 = vshrl.u32 %v326, 7
        %v328 = vsub.s32 2, %v327
        %v329 = vrot.slane %v299, %v328
        %v330 = vmul.f32 %v324, %v329
        %v331 = vadd.f32 %v321, %v330
        %332 = vset.pattern.permute.xlu0 3
        %333 = vperm.xlu0 %332, %v300
        %v334 = vpop.permute.xlu0 %333
        %v336 = vlaneseq
        %v337 = vshrl.u32 %v336, 7
        %v338 = vsub.s32 3, %v337
        %v339 = vrot.slane %v299, %v338
        %v340 = vmul.f32 %v334, %v339
        %v341 = vadd.f32 %v331, %v340
        %v342 = vld [vmem:[%s4] sm:$0xff]
        %344 = vset.pattern.permute.xlu0 0
        %345 = vperm.xlu0 %344, %v342
        %v346 = vpop.permute.xlu0 %345
        %v348 = vadd.f32 %v341, %v346
        %349 = vst [vmem:[%s241] sm:$0xff] %v348
        %s350 = sand.u32 %s153, 1
        %s351 = scalar_lea.sflag [#allocation3], %s350
        %s352 = sand.u32 %s153, 1
        %s353 = smul.addr %s352, 8
        %s354 = scalar_lea.vmem [#allocation2], %s353
        // Predicated region
        $region41: #{tpu_custom_call.1} parent=39 // pred_check
          %p355 = pneg %p163
        $region42: #{tpu_custom_call.1} parent=39 // pred_check_branch
          %357 = sbr.rel (%p355) target = $region44
        $region43: #{tpu_custom_call.1} parent=39 // pred_region
          %s359 = ssub.s32 128, 128
          %360 = vsyncadd %s351, %s359
          %s361 = sadd.s32 %s24, %s23
          %s362 = smul.addr %s361, 128
          %s363 = scalar_lea.hbm %s5, %s362
          %s365 = sshll.u32 %s354, 4
          %s366 = int_to_ptr.vmem [resolvable:$true] %s365
          %368 = dma.vmem_to_hbm [thread:$0]  %s366, 128, %s363, %s351
        $region44: #{tpu_custom_call.1} parent=39 // pred_fallthru
          _
      $region40: #{tpu_custom_call.1} parent=5 // pred_fallthru
        _
      %p369 = scmp.le.s32.totalorder 2, %s14
      // Predicated region
      $region45: #{tpu_custom_call.1} parent=5 // pred_check
        %p370 = pneg %p369
      $region46: #{tpu_custom_call.1} parent=5 // pred_check_branch
        %372 = sbr.rel (%p370) target = $region48
      $region47: #{tpu_custom_call.1} parent=5 // pred_region
        %s373 = ssub.s32 %s14, 2
        // Predicated region
        $region49: #{tpu_custom_call.1} parent=47 // pred_check
          %p374 = pneg %p169
        $region50: #{tpu_custom_call.1} parent=47 // pred_check_branch
          %376 = sbr.rel (%p374) target = $region52
        $region51: #{tpu_custom_call.1} parent=47 // pred_region
          %s377 = sand.u32 %s154, 1
          %s378 = scalar_lea.sflag [#allocation3], %s377
          %s379 = sand.u32 %s154, 1
          %s380 = smul.addr %s379, 8
          %s381 = scalar_lea.vmem [#allocation2], %s380
          %382 = dma.done %s378, 128
        $region52: #{tpu_custom_call.1} parent=47 // pred_fallthru
          _
      $region48: #{tpu_custom_call.1} parent=5 // pred_fallthru
        _
    $region6: #{tpu_custom_call.1} parent=1 // loop_footer
      %s18 = sadd.s32 1, %s14
    $region7: #{tpu_custom_call.1} parent=1 // loop_footer_branch
      %13 = sbr.rel target = $region3
    $region8: #{tpu_custom_call.1} parent=1 // loop_exit
      _
    %383 = vsyncpa [#allocation3], 1
    %s384 = scalar_lea.sflag [#allocation3], 1
    %385 = vsyncpa %s384, 1

</llo_original>
